<compile_context>
chip_gen: v6e
topology: v6e:2x2x1
jax: 0.10.0
libtpu: 0.0.40
codegen_flags: <defaults>
</compile_context>

<pallas_src>
import functools

import jax
import jax.numpy as jnp
from jax.experimental import pallas as pl
from jax.experimental.pallas import tpu as pltpu


def _mlp_kernel(x_ref, w1_ref, b1_ref, w2_ref, b2_ref, out_ref):
    """One batch tile of the forward pass.

    x_ref  : [TB, 172]  input rows (VMEM), f32 or bf16
    w1_ref : [172, H]   fc1 weight, stored [in, out]
    b1_ref : [1, H]     fc1 bias (f32)
    w2_ref : [1, H]     fc2 weight row (f32)
    b2_ref : [1, 1]     fc2 bias (f32)
    out_ref: [1, TB]    lane-dense output row (f32)
    """
    # fc1 + bias + ReLU (MXU matmul, f32 accumulate regardless of input dtype).
    h = jnp.dot(x_ref[...], w1_ref[...], preferred_element_type=jnp.float32)
    h = jnp.maximum(h + b1_ref[...], 0.0)                       # [TB, H] f32

    # fc2: contract H with the batch landing on the lane axis of the result,
    # so the store is a full-lane-width [1, TB] write (no [*, 1] masked path).
    o = jax.lax.dot_general(
        w2_ref[...], h,
        dimension_numbers=(((1,), (1,)), ((), ())),
        preferred_element_type=jnp.float32)                     # [1, TB]
    out_ref[...] = jax.nn.sigmoid(o + b2_ref[...]).astype(out_ref.dtype)


def _round_up(n, m):
    return ((n + m - 1) // m) * m


@functools.partial(jax.jit, static_argnames=("block_batch",))
def dota2_mlp_forward(x, w1, b1, w2, b2, *, block_batch=4096):
    """x: [B, 172] -> [B, 1] sigmoid probabilities.

    Parameter layout: w1 [172, H] (transposed vs. PyTorch's [H, 172]),
    b1 [1, H], w2 [1, H] (PyTorch fc2.weight layout), b2 [1, 1].
    x (and w1) may be bfloat16 for an HBM-bound ~2x speedup; accumulation is
    always float32.
    """
    B, F = x.shape
    H = w1.shape[1]

    b1_row = b1.reshape(1, H).astype(jnp.float32)
    w2_row = w2.reshape(1, H).astype(jnp.float32)
    b2_s = b2.reshape(1, 1).astype(jnp.float32)

    # Batch tile: at most block_batch rows, but capped at ~half the batch
    # (rounded to 128 lanes) so the parallel grid axis has >= 2 steps and both
    # v7x TensorCores get work; always a multiple of 128 for lane-dense output.
    TB = max(128, min(_round_up(block_batch, 128),
                      _round_up(pl.cdiv(B, 2), 128)))
    grid = (pl.cdiv(B, TB),)   # no host-side padding; boundary block is masked

    cost = pl.CostEstimate(
        flops=2 * B * H * (F + 1),
        transcendentals=B,                                   # one sigmoid/row
        bytes_accessed=(B * F * x.dtype.itemsize             # stream x
                        + B * 4                              # output row
                        + F * H * w1.dtype.itemsize          # weights (once)
                        + 2 * H * 4 + 4),
    )

    out = pl.pallas_call(
        _mlp_kernel,
        out_shape=jax.ShapeDtypeStruct((1, B), jnp.float32),
        grid=grid,
        in_specs=[
            pl.BlockSpec((TB, F), lambda i: (i, 0)),   # x: new tile per step
            pl.BlockSpec((F, H), lambda i: (0, 0)),    # w1: VMEM-resident
            pl.BlockSpec((1, H), lambda i: (0, 0)),    # b1: VMEM-resident
            pl.BlockSpec((1, H), lambda i: (0, 0)),    # w2: VMEM-resident
            pl.BlockSpec((1, 1), lambda i: (0, 0)),    # b2
        ],
        out_specs=pl.BlockSpec((1, TB), lambda i: (0, i)),
        compiler_params=pltpu.CompilerParams(
            dimension_semantics=("parallel",),         # v7x: shard over 2 TCs
            vmem_limit_bytes=32 * 1024 * 1024,
        ),
        cost_estimate=cost,
    )(x, w1, b1_row, w2_row, b2_s)

    # (1, B) -> (B, 1): pure reshape of contiguous data, no transpose.
    return out.reshape(B, 1)


def init_params(key, input_size=172, hidden_size=32):
    """Deterministic init matching nn.Linear's default U(-1/sqrt(fan_in), +)."""
    k1, k2, k3, k4 = jax.random.split(key, 4)
    bound1 = 1.0 / jnp.sqrt(input_size)
    bound2 = 1.0 / jnp.sqrt(hidden_size)
    # w1 stored as [in, out] (transposed vs. PyTorch) for x @ W on the MXU.
    w1 = jax.random.uniform(k1, (input_size, hidden_size), jnp.float32,
                            -bound1, bound1)
    b1 = jax.random.uniform(k2, (1, hidden_size), jnp.float32, -bound1, bound1)
    w2 = jax.random.uniform(k3, (1, hidden_size), jnp.float32, -bound2, bound2)
    b2 = jax.random.uniform(k4, (1, 1), jnp.float32, -bound2, bound2)
    return w1, b1, w2, b2


if __name__ == "__main__":
    key = jax.random.PRNGKey(0)
    k_x, k_p, k_x2 = jax.random.split(key, 3)

    input_size = 172   # fixed by Dota2MLP
    hidden_size = 32

    w1, b1, w2, b2 = init_params(k_p, input_size, hidden_size)

    def reference(x):
        return jax.nn.sigmoid(jnp.maximum(x @ w1 + b1, 0.0) @ w2.T + b2)

    # Small-batch f32 check (single, boundary-masked grid step).
    x_small = jax.random.normal(k_x, (8, input_size), dtype=jnp.float32)
    out_small = jax.block_until_ready(dota2_mlp_forward(x_small, w1, b1, w2, b2))
    assert out_small.shape == (8, 1)
    assert jnp.allclose(out_small, reference(x_small), atol=2e-5, rtol=2e-5)

    # Multi-tile check: non-divisible batch (300 = 2x128 + 44), >= 2 grid
    # steps, no host-side padding copy of x.
    x_big = jax.random.normal(k_x2, (300, input_size), dtype=jnp.float32)
    out_big = jax.block_until_ready(
        dota2_mlp_forward(x_big, w1, b1, w2, b2, block_batch=128))
    assert out_big.shape == (300, 1)
    assert jnp.allclose(out_big, reference(x_big), atol=2e-5, rtol=2e-5)

    # bf16 fast path: caller supplies x/w1 in bf16 (half the HBM read bytes);
    # the kernel still accumulates in f32, so accuracy stays within bf16 noise.
    out_bf16 = jax.block_until_ready(
        dota2_mlp_forward(x_big.astype(jnp.bfloat16), w1.astype(jnp.bfloat16),
                          b1, w2, b2, block_batch=128))
    assert out_bf16.shape == (300, 1)
    assert jnp.allclose(out_bf16, reference(x_big), atol=2e-2, rtol=2e-2)

    print("KERNEL_OK")
</pallas_src>

<mosaic_0001>
module attributes {stable_mosaic.version = 11 : i64} {
  func.func @_mlp_kernel(%arg0: i32, %arg1: memref<128x172xf32, #tpu.memory_space<vmem>>, %arg2: memref<172x32xf32, #tpu.memory_space<vmem>>, %arg3: memref<1x32xf32, #tpu.memory_space<vmem>>, %arg4: memref<1x32xf32, #tpu.memory_space<vmem>>, %arg5: memref<1x1xf32, #tpu.memory_space<vmem>>, %arg6: memref<1x128xf32, #tpu.memory_space<vmem>>) attributes {dimension_semantics = [#tpu.dimension_semantics<parallel>], iteration_bounds = array<i64: 1>, scalar_prefetch = 0 : i64, scratch_operands = 0 : i64, tpu.core_type = #tpu.core_type<tc>, window_params = [{transform_indices = @transform_0, window_bounds = array<i64: 128, 172>}, {pipeline_mode = #tpu.pipeline_mode<synchronous>, transform_indices = @transform_1, window_bounds = array<i64: 172, 32>}, {pipeline_mode = #tpu.pipeline_mode<synchronous>, transform_indices = @transform_2, window_bounds = array<i64: 1, 32>}, {pipeline_mode = #tpu.pipeline_mode<synchronous>, transform_indices = @transform_3, window_bounds = array<i64: 1, 32>}, {pipeline_mode = #tpu.pipeline_mode<synchronous>, transform_indices = @transform_4, window_bounds = array<i64: 1, 1>}, {transform_indices = @transform_5, window_bounds = array<i64: 1, 128>}]} {
    %c0 = arith.constant 0 : index
    %c0_0 = arith.constant 0 : index
    %0 = vector.load %arg1[%c0, %c0_0] : memref<128x172xf32, #tpu.memory_space<vmem>>, vector<128x172xf32>
    %c0_1 = arith.constant 0 : index
    %c0_2 = arith.constant 0 : index
    %1 = vector.load %arg2[%c0_1, %c0_2] : memref<172x32xf32, #tpu.memory_space<vmem>>, vector<172x32xf32>
    %cst = arith.constant dense<0.000000e+00> : vector<128x32xf32>
    %2 = tpu.matmul %0, %1, %cst {dimension_numbers = #tpu.dot_dimension_numbers<[1], [0], [0], [1], [0, 0, 1, 1], [], []>} : vector<128x172xf32>, vector<172x32xf32>, vector<128x32xf32> -> vector<128x32xf32>
    %c0_3 = arith.constant 0 : index
    %c0_4 = arith.constant 0 : index
    %3 = vector.load %arg3[%c0_3, %c0_4] : memref<1x32xf32, #tpu.memory_space<vmem>>, vector<1x32xf32>
    %4 = vector.broadcast %3 : vector<1x32xf32> to vector<128x32xf32>
    %5 = arith.addf %2, %4 : vector<128x32xf32>
    %cst_5 = arith.constant 0.000000e+00 : f32
    %6 = vector.broadcast %cst_5 : f32 to vector<128x32xf32>
    %7 = arith.maximumf %5, %6 : vector<128x32xf32>
    %c0_6 = arith.constant 0 : index
    %c0_7 = arith.constant 0 : index
    %8 = vector.load %arg4[%c0_6, %c0_7] : memref<1x32xf32, #tpu.memory_space<vmem>>, vector<1x32xf32>
    %cst_8 = arith.constant dense<0.000000e+00> : vector<1x128xf32>
    %9 = tpu.matmul %8, %7, %cst_8 {dimension_numbers = #tpu.dot_dimension_numbers<[1], [1], [0], [0], [0, 0, 1, 0], [], []>} : vector<1x32xf32>, vector<128x32xf32>, vector<1x128xf32> -> vector<1x128xf32>
    %c0_9 = arith.constant 0 : index
    %c0_10 = arith.constant 0 : index
    %10 = vector.load %arg5[%c0_9, %c0_10] : memref<1x1xf32, #tpu.memory_space<vmem>>, vector<1x1xf32>
    %11 = vector.broadcast %10 : vector<1x1xf32> to vector<1x128xf32>
    %12 = arith.addf %9, %11 : vector<1x128xf32>
    %13 = arith.negf %12 : vector<1x128xf32>
    %14 = math.exp %13 : vector<1x128xf32>
    %cst_11 = arith.constant 1.000000e+00 : f32
    %15 = vector.broadcast %cst_11 : f32 to vector<1x128xf32>
    %16 = arith.addf %15, %14 : vector<1x128xf32>
    %17 = arith.divf %15, %16 : vector<1x128xf32>
    %c0_12 = arith.constant 0 : index
    %c0_13 = arith.constant 0 : index
    %18 = vector.load %arg6[%c0_12, %c0_13] : memref<1x128xf32, #tpu.memory_space<vmem>>, vector<1x128xf32>
    tpu.vector_store %arg6[%c0_12, %c0_13], %17 {strides = array<i32>} : memref<1x128xf32, #tpu.memory_space<vmem>>, vector<1x128xf32>,
    return
  }
  func.func @transform_0(%arg0: i32) -> (i32, i32) {
    %c0_i32 = arith.constant 0 : i32
    %c0_i32_0 = arith.constant 0 : i32
    return %arg0, %c0_i32 : i32, i32
  }
  func.func @transform_1(%arg0: i32) -> (i32, i32) {
    %c0_i32 = arith.constant 0 : i32
    %c0_i32_0 = arith.constant 0 : i32
    %c0_i32_1 = arith.constant 0 : i32
    return %c0_i32, %c0_i32_0 : i32, i32
  }
  func.func @transform_2(%arg0: i32) -> (i32, i32) {
    %c0_i32 = arith.constant 0 : i32
    %c0_i32_0 = arith.constant 0 : i32
    %c0_i32_1 = arith.constant 0 : i32
    return %c0_i32, %c0_i32_0 : i32, i32
  }
  func.func @transform_3(%arg0: i32) -> (i32, i32) {
    %c0_i32 = arith.constant 0 : i32
    %c0_i32_0 = arith.constant 0 : i32
    %c0_i32_1 = arith.constant 0 : i32
    return %c0_i32, %c0_i32_0 : i32, i32
  }
  func.func @transform_4(%arg0: i32) -> (i32, i32) {
    %c0_i32 = arith.constant 0 : i32
    %c0_i32_0 = arith.constant 0 : i32
    %c0_i32_1 = arith.constant 0 : i32
    return %c0_i32, %c0_i32_0 : i32, i32
  }
  func.func @transform_5(%arg0: i32) -> (i32, i32) {
    %c0_i32 = arith.constant 0 : i32
    %c0_i32_0 = arith.constant 0 : i32
    return %c0_i32, %arg0 : i32, i32
  }
}

</mosaic_0001>

<llo_original>
// kernel: dota2_mlp_forward.1
$region0: #{dota2_mlp_forward.1}
  #allocation0 [shape = 'u32[]', space=smem, size = 0x4, offset = 0x4, fixed_abs, tag = 'smem constant byte address 0x4 - core index']
  #allocation1 [shape = 'u32[144,128]{1,0:T(1,128)}', space=vmem, size = 0x12000, scoped, tag = 'internal scratch']
  #allocation2 [shape = 'f32[1,1]{1,0:T(1,128)S(1)}', space=vmem, size = 0x200, scoped, tag = 'scoped memory for dota2_mlp_forward.1']
  %s0 = inlined_call_operand.vmem [shape: f32[8,172], index: 0, kind: input, shape index: {}]
  %s1 = inlined_call_operand.vmem [shape: f32[172,32], index: 1, kind: input, shape index: {}]
  %s2 = inlined_call_operand.vmem [shape: f32[1,32], index: 2, kind: input, shape index: {}]
  %s3 = inlined_call_operand.vmem [shape: f32[1,32], index: 3, kind: input, shape index: {}]
  %s4 = inlined_call_operand.<no memory space> [shape: f32[1,1], index: 4, kind: input, shape index: {}]
  %s5 = inlined_call_operand.hbm [shape: f32[1,8], index: 5, kind: output, shape index: {}]
  %s6 = sld [smem:[#allocation0]]
  $region30: #{dota2_mlp_forward.1} parent=0
    _
  %s8 = ssub.s32 1, %s6
  %s9 = scalar_select 0, %s8, %s6
  %v10 = vstv %s4
  %11 = vst [vmem:[#allocation2] sm:$0x1] %v10
  $region1: #{dota2_mlp_forward.1} parent=0
    #allocation3 [shape = 'u8[512]{0}', space=vmem, size = 0x400, scoped, tag = 'output window, operand 0, single buffered']
    #allocation4 [shape = 's32[1]{0}', space=sflag, size = 0x4, scoped, tag = 'scoped memory for dota2_mlp_forward.1']
    %12 = vsyncpa [#allocation4], 0
    // Predicated region
    $region2: #{dota2_mlp_forward.1} parent=1 // pred_check
      _
    $region3: #{dota2_mlp_forward.1} parent=1 // pred_check_branch
      %14 = sbr.rel (0) target = $region5
    $region4: #{dota2_mlp_forward.1} parent=1 // pred_region
      _
    $region5: #{dota2_mlp_forward.1} parent=1 // pred_fallthru
      _
    // Predicated region
    $region6: #{dota2_mlp_forward.1} parent=1 // pred_check
      _
    $region7: #{dota2_mlp_forward.1} parent=1 // pred_check_branch
      %16 = sbr.rel (0) target = $region9
    $region8: #{dota2_mlp_forward.1} parent=1 // pred_region
      _
    $region9: #{dota2_mlp_forward.1} parent=1 // pred_fallthru
      _
    // Predicated region
    $region10: #{dota2_mlp_forward.1} parent=1 // pred_check
      _
    $region11: #{dota2_mlp_forward.1} parent=1 // pred_check_branch
      %18 = sbr.rel (0) target = $region13
    $region12: #{dota2_mlp_forward.1} parent=1 // pred_region
      _
    $region13: #{dota2_mlp_forward.1} parent=1 // pred_fallthru
      _
    // Predicated region
    $region14: #{dota2_mlp_forward.1} parent=1 // pred_check
      _
    $region15: #{dota2_mlp_forward.1} parent=1 // pred_check_branch
      %20 = sbr.rel (0) target = $region17
    $region16: #{dota2_mlp_forward.1} parent=1 // pred_region
      _
    $region17: #{dota2_mlp_forward.1} parent=1 // pred_fallthru
      _
    // Predicated region
    $region18: #{dota2_mlp_forward.1} parent=1 // pred_check
      _
    $region19: #{dota2_mlp_forward.1} parent=1 // pred_check_branch
      %22 = sbr.rel (0) target = $region21
    $region20: #{dota2_mlp_forward.1} parent=1 // pred_region
      _
    $region21: #{dota2_mlp_forward.1} parent=1 // pred_fallthru
      _
    %v23 = vld [vmem:[%s0] sm:$0xff]
    %v24 = vld [vmem:[%s0 + $0x8] sm:$0xff]
    %v25 = vld [vmem:[%s0 + $0x10] sm:$0xff]
    %v26 = vld [vmem:[%s0 + $0x18] sm:$0xff]
    %v27 = vld [vmem:[%s0 + $0x20] sm:$0xff]
    %v28 = vld [vmem:[%s0 + $0x28] sm:$0xff]
    %v29 = vld [vmem:[%s0 + $0x30] sm:$0xff]
    %v30 = vld [vmem:[%s0 + $0x38] sm:$0xff]
    %v31 = vld [vmem:[%s0 + $0x40] sm:$0xff]
    %v32 = vld [vmem:[%s0 + $0x48] sm:$0xff]
    %v33 = vld [vmem:[%s0 + $0x50] sm:$0xff]
    %v34 = vld [vmem:[%s0 + $0x58] sm:$0xff]
    %v35 = vld [vmem:[%s0 + $0x60] sm:$0xff]
    %v36 = vld [vmem:[%s0 + $0x68] sm:$0xff]
    %v37 = vld [vmem:[%s0 + $0x70] sm:$0xff]
    %v38 = vld [vmem:[%s0 + $0x78] sm:$0xff]
    %v39 = vld [vmem:[%s0 + $0x80] sm:$0xff]
    %v40 = vld [vmem:[%s0 + $0x88] sm:$0xff]
    %v41 = vld [vmem:[%s0 + $0x90] sm:$0xff]
    %v42 = vld [vmem:[%s0 + $0x98] sm:$0xff]
    %v43 = vld [vmem:[%s0 + $0xa0] sm:$0xff]
    %v44 = vld [vmem:[%s0 + $0xa8] sm:$0xff]
    %v45 = vld [vmem:[%s0 + $0xb0] sm:$0xff]
    %v46 = vld [vmem:[%s0 + $0xb8] sm:$0xff]
    %v47 = vld [vmem:[%s0 + $0xc0] sm:$0xff]
    %v48 = vld [vmem:[%s0 + $0xc8] sm:$0xff]
    %v49 = vld [vmem:[%s0 + $0xd0] sm:$0xff]
    %v50 = vld [vmem:[%s0 + $0xd8] sm:$0xff]
    %v51 = vld [vmem:[%s0 + $0xe0] sm:$0xff]
    %v52 = vld [vmem:[%s0 + $0xe8] sm:$0xff]
    %v53 = vld [vmem:[%s0 + $0xf0] sm:$0xff]
    %v54 = vld [vmem:[%s0 + $0xf8] sm:$0xff]
    %v55 = vld [vmem:[%s1] sm:$0xff]
    %v56 = vld [vmem:[%s1 + $0x8] sm:$0xff]
    %v57 = vld [vmem:[%s1 + $0x10] sm:$0xff]
    %v58 = vld [vmem:[%s1 + $0x18] sm:$0xff]
    %v59 = vld [vmem:[%s1 + $0x20] sm:$0xff]
    %v60 = vld [vmem:[%s1 + $0x28] sm:$0xff]
    %v61 = vld [vmem:[%s1 + $0x30] sm:$0xff]
    %v62 = vld [vmem:[%s1 + $0x38] sm:$0xff]
    %v63 = vld [vmem:[%s1 + $0x40] sm:$0xff]
    %v64 = vld [vmem:[%s1 + $0x48] sm:$0xff]
    %v65 = vld [vmem:[%s1 + $0x50] sm:$0xff]
    %v66 = vld [vmem:[%s1 + $0x58] sm:$0xff]
    %v67 = vld [vmem:[%s1 + $0x60] sm:$0xff]
    %v68 = vld [vmem:[%s1 + $0x68] sm:$0xff]
    %v69 = vld [vmem:[%s1 + $0x70] sm:$0xff]
    %v70 = vld [vmem:[%s1 + $0x78] sm:$0xff]
    %v71 = vld [vmem:[%s1 + $0x80] sm:$0xff]
    %v72 = vld [vmem:[%s1 + $0x88] sm:$0xff]
    %v73 = vld [vmem:[%s1 + $0x90] sm:$0xff]
    %v74 = vld [vmem:[%s1 + $0x98] sm:$0xff]
    %v75 = vld [vmem:[%s1 + $0xa0] sm:$0xff]
    %v76 = vld [vmem:[%s1 + $0xa8] sm:$0xf]
    %v77 = vld [vmem:[%s2] sm:$0x1]
    %v79 = vlaneseq
    %v80 = vshrl.u32 %v79, 7
    %v81 = vsub.s32 0, %v80
    %v82 = vrot.slane %v77, %v81
    %vm84 = vcmask 359424
    %v86 = vsel %vm84, %v24, 0
    %v89 = vsel %vm84, %v26, 0
    %v92 = vsel %vm84, %v28, 0
    %v95 = vsel %vm84, %v30, 0
    %v98 = vsel %vm84, %v32, 0
    %v101 = vsel %vm84, %v34, 0
    %v104 = vsel %vm84, %v36, 0
    %v107 = vsel %vm84, %v38, 0
    %v110 = vsel %vm84, %v40, 0
    %v113 = vsel %vm84, %v42, 0
    %v116 = vsel %vm84, %v44, 0
    %v119 = vsel %vm84, %v46, 0
    %v122 = vsel %vm84, %v48, 0
    %v125 = vsel %vm84, %v50, 0
    %v128 = vsel %vm84, %v52, 0
    %v131 = vsel %vm84, %v54, 0
    %vm133 = vcmask 1043456
    %v135 = vsel %vm133, %v76, 0
    %137 = vmatprep.subr.mxu0 0.0
    %138 = vmatpush1.msra.mxu0 %v70
    %139 = vmatprep.subr.mxu0 0.0
    %140 = vmatpush1.msra.mxu0 %v69
    %141 = vmatprep.subr.mxu0 0.0
    %142 = vmatpush1.msra.mxu0 %v68
    %143 = vmatprep.subr.mxu0 0.0
    %144 = vmatpush1.msra.mxu0 %v67
    %145 = vmatprep.subr.mxu0 0.0
    %146 = vmatpush1.msra.mxu0 %v66
    %147 = vmatprep.subr.mxu0 0.0
    %148 = vmatpush1.msra.mxu0 %v65
    %149 = vmatprep.subr.mxu0 0.0
    %150 = vmatpush1.msra.mxu0 %v64
    %151 = vmatprep.subr.mxu0 0.0
    %152 = vmatpush1.msra.mxu0 %v63
    %153 = vmatprep.subr.mxu0 0.0
    %154 = vmatpush1.msra.mxu0 %v62
    %155 = vmatprep.subr.mxu0 0.0
    %156 = vmatpush1.msra.mxu0 %v61
    %157 = vmatprep.subr.mxu0 0.0
    %158 = vmatpush1.msra.mxu0 %v60
    %159 = vmatprep.subr.mxu0 0.0
    %160 = vmatpush1.msra.mxu0 %v59
    %161 = vmatprep.subr.mxu0 0.0
    %162 = vmatpush1.msra.mxu0 %v58
    %163 = vmatprep.subr.mxu0 0.0
    %164 = vmatpush1.msra.mxu0 %v57
    %165 = vmatprep.subr.mxu0 0.0
    %166 = vmatpush1.msra.mxu0 %v56
    %167 = vmatprep.subr.mxu0 0.0
    %168 = vmatpush1.msra.mxu0 %v55
    %169 = vmatprep.subr.mxu0 0.0
    %170 = vmatpush2.msra.mxu0 0.0
    %171 = vmatprep.subr.mxu0 0.0
    %172 = vmatpush2.msra.mxu0 0.0
    %173 = vmatprep.subr.mxu0 0.0
    %174 = vmatpush2.msra.mxu0 0.0
    %175 = vmatprep.subr.mxu0 0.0
    %176 = vmatpush2.msra.mxu0 0.0
    %177 = vmatprep.subr.mxu0 0.0
    %178 = vmatpush2.msra.mxu0 0.0
    %179 = vmatprep.subr.mxu0 0.0
    %180 = vmatpush2.msra.mxu0 0.0
    %181 = vmatprep.subr.mxu0 0.0
    %182 = vmatpush2.msra.mxu0 0.0
    %183 = vmatprep.subr.mxu0 0.0
    %184 = vmatpush2.msra.mxu0 0.0
    %185 = vmatprep.subr.mxu0 0.0
    %186 = vmatpush2.msra.mxu0 0.0
    %187 = vmatprep.subr.mxu0 0.0
    %188 = vmatpush2.msra.mxu0 0.0
    %189 = vmatprep.subr.mxu0 0.0
    %190 = vmatpush2.msra.mxu0 %v135
    %191 = vmatprep.subr.mxu0 0.0
    %192 = vmatpush2.msra.mxu0 %v75
    %193 = vmatprep.subr.mxu0 0.0
    %194 = vmatpush2.msra.mxu0 %v74
    %195 = vmatprep.subr.mxu0 0.0
    %196 = vmatpush2.msra.mxu0 %v73
    %197 = vmatprep.subr.mxu0 0.0
    %198 = vmatpush2.msra.mxu0 %v72
    %199 = vmatprep.subr.mxu0 0.0
    %200 = vmatpush2.msra.mxu0 %v71
    %201 = vmatprep.mubr.f32.mxu0 %v86
    %202 = vmatmul.mubr.f32.gmra.mxu0 %v23
    %v203 = vpop.f32.mrf.mxu0
    %v204 = vadd.f32 %v82, %v203
    %v205 = vpop.f32.mrf.mxu0
    %206 = vmatprep.mubr.f32.mxu0 %v89
    %207 = vmatmul.mubr.f32.gmra.mxu0 %v25
    %v208 = vpop.f32.mrf.mxu0
    %v209 = vadd.f32 %v82, %v208
    %v210 = vpop.f32.mrf.mxu0
    %211 = vmatprep.mubr.f32.mxu0 %v92
    %212 = vmatmul.mubr.f32.gmra.mxu0 %v27
    %v213 = vpop.f32.mrf.mxu0
    %v214 = vadd.f32 %v82, %v213
    %v215 = vpop.f32.mrf.mxu0
    %216 = vmatprep.mubr.f32.mxu0 %v95
    %217 = vmatmul.mubr.f32.gmra.mxu0 %v29
    %v218 = vpop.f32.mrf.mxu0
    %v219 = vadd.f32 %v82, %v218
    %v220 = vpop.f32.mrf.mxu0
    %221 = vmatprep.mubr.f32.mxu0 %v98
    %222 = vmatmul.mubr.f32.gmra.mxu0 %v31
    %v223 = vpop.f32.mrf.mxu0
    %v224 = vadd.f32 %v82, %v223
    %v225 = vpop.f32.mrf.mxu0
    %226 = vmatprep.mubr.f32.mxu0 %v101
    %227 = vmatmul.mubr.f32.gmra.mxu0 %v33
    %v228 = vpop.f32.mrf.mxu0
    %v229 = vadd.f32 %v82, %v228
    %v230 = vpop.f32.mrf.mxu0
    %231 = vmatprep.mubr.f32.mxu0 %v104
    %232 = vmatmul.mubr.f32.gmra.mxu0 %v35
    %v233 = vpop.f32.mrf.mxu0
    %v234 = vadd.f32 %v82, %v233
    %v235 = vpop.f32.mrf.mxu0
    %236 = vmatprep.mubr.f32.mxu0 %v107
    %237 = vmatmul.mubr.f32.gmra.mxu0 %v37
    %v238 = vpop.f32.mrf.mxu0
    %v239 = vadd.f32 %v82, %v238
    %v240 = vpop.f32.mrf.mxu0
    %241 = vmatprep.mubr.f32.mxu0 %v110
    %242 = vmatmul.mubr.f32.gmra.mxu0 %v39
    %v243 = vpop.f32.mrf.mxu0
    %v244 = vadd.f32 %v82, %v243
    %v245 = vpop.f32.mrf.mxu0
    %246 = vmatprep.mubr.f32.mxu0 %v113
    %247 = vmatmul.mubr.f32.gmra.mxu0 %v41
    %v248 = vpop.f32.mrf.mxu0
    %v249 = vadd.f32 %v82, %v248
    %v250 = vpop.f32.mrf.mxu0
    %251 = vmatprep.mubr.f32.mxu0 %v116
    %252 = vmatmul.mubr.f32.gmra.mxu0 %v43
    %v253 = vpop.f32.mrf.mxu0
    %v254 = vadd.f32 %v82, %v253
    %v255 = vpop.f32.mrf.mxu0
    %256 = vmatprep.mubr.f32.mxu0 %v119
    %257 = vmatmul.mubr.f32.gmra.mxu0 %v45
    %v258 = vpop.f32.mrf.mxu0
    %v259 = vadd.f32 %v82, %v258
    %v260 = vpop.f32.mrf.mxu0
    %261 = vmatprep.mubr.f32.mxu0 %v122
    %262 = vmatmul.mubr.f32.gmra.mxu0 %v47
    %v263 = vpop.f32.mrf.mxu0
    %v264 = vadd.f32 %v82, %v263
    %v265 = vpop.f32.mrf.mxu0
    %266 = vmatprep.mubr.f32.mxu0 %v125
    %267 = vmatmul.mubr.f32.gmra.mxu0 %v49
    %v268 = vpop.f32.mrf.mxu0
    %v269 = vadd.f32 %v82, %v268
    %v270 = vpop.f32.mrf.mxu0
    %271 = vmatprep.mubr.f32.mxu0 %v128
    %272 = vmatmul.mubr.f32.gmra.mxu0 %v51
    %v273 = vpop.f32.mrf.mxu0
    %v274 = vadd.f32 %v82, %v273
    %v275 = vpop.f32.mrf.mxu0
    %276 = vmatprep.mubr.f32.mxu0 %v131
    %277 = vmatmul.mubr.f32.gmra.mxu0 %v53
    %v278 = vpop.f32.mrf.mxu0
    %v279 = vadd.f32 %v82, %v278
    %v280 = vpop.f32.mrf.mxu0
    %281 = vdwg.mxu0
    %v282 = vmax.f32 %v204, 0.0
    %v283 = vmax.f32 %v209, 0.0
    %v284 = vmax.f32 %v214, 0.0
    %v285 = vmax.f32 %v219, 0.0
    %v286 = vmax.f32 %v224, 0.0
    %v287 = vmax.f32 %v229, 0.0
    %v288 = vmax.f32 %v234, 0.0
    %v289 = vmax.f32 %v239, 0.0
    %v290 = vmax.f32 %v244, 0.0
    %v291 = vmax.f32 %v249, 0.0
    %v292 = vmax.f32 %v254, 0.0
    %v293 = vmax.f32 %v259, 0.0
    %v294 = vmax.f32 %v264, 0.0
    %v295 = vmax.f32 %v269, 0.0
    %v296 = vmax.f32 %v274, 0.0
    %v297 = vmax.f32 %v279, 0.0
    %v298 = vld [vmem:[%s3] sm:$0x1]
    %v299 = vld [vmem:[#allocation2] sm:$0x1]
    %301 = vset.pattern.permute.xlu0 0
    %302 = vperm.xlu0 %301, %v299
    %v303 = vpop.permute.xlu0 %302
    %v305 = vlaneseq
    %v306 = vshrl.u32 %v305, 7
    %v307 = vsub.s32 0, %v306
    %v308 = vrot.slane %v303, %v307
    %vm309 = vcmask 261120
    %v311 = vsel %vm309, %v298, 0
    %v314 = vsel %vm309, %v282, 0
    %v317 = vsel %vm309, %v283, 0
    %v320 = vsel %vm309, %v284, 0
    %v323 = vsel %vm309, %v285, 0
    %v326 = vsel %vm309, %v286, 0
    %v329 = vsel %vm309, %v287, 0
    %v332 = vsel %vm309, %v288, 0
    %v335 = vsel %vm309, %v289, 0
    %v338 = vsel %vm309, %v290, 0
    %v341 = vsel %vm309, %v291, 0
    %v344 = vsel %vm309, %v292, 0
    %v347 = vsel %vm309, %v293, 0
    %v350 = vsel %vm309, %v294, 0
    %v353 = vsel %vm309, %v295, 0
    %v356 = vsel %vm309, %v296, 0
    %v359 = vsel %vm309, %v297, 0
    %361 = vmatprep.subr.mxu0 0.0
    %362 = vmatpush1.xpose.msra.mxu0 %v359
    %363 = vmatprep.subr.mxu0 0.0
    %364 = vmatpush1.xpose.msra.mxu0 %v356
    %365 = vmatprep.subr.mxu0 0.0
    %366 = vmatpush1.xpose.msra.mxu0 %v353
    %367 = vmatprep.subr.mxu0 0.0
    %368 = vmatpush1.xpose.msra.mxu0 %v350
    %369 = vmatprep.subr.mxu0 0.0
    %370 = vmatpush1.xpose.msra.mxu0 %v347
    %371 = vmatprep.subr.mxu0 0.0
    %372 = vmatpush1.xpose.msra.mxu0 %v344
    %373 = vmatprep.subr.mxu0 0.0
    %374 = vmatpush1.xpose.msra.mxu0 %v341
    %375 = vmatprep.subr.mxu0 0.0
    %376 = vmatpush1.xpose.msra.mxu0 %v338
    %377 = vmatprep.subr.mxu0 0.0
    %378 = vmatpush1.xpose.msra.mxu0 %v335
    %379 = vmatprep.subr.mxu0 0.0
    %380 = vmatpush1.xpose.msra.mxu0 %v332
    %381 = vmatprep.subr.mxu0 0.0
    %382 = vmatpush1.xpose.msra.mxu0 %v329
    %383 = vmatprep.subr.mxu0 0.0
    %384 = vmatpush1.xpose.msra.mxu0 %v326
    %385 = vmatprep.subr.mxu0 0.0
    %386 = vmatpush1.xpose.msra.mxu0 %v323
    %387 = vmatprep.subr.mxu0 0.0
    %388 = vmatpush1.xpose.msra.mxu0 %v320
    %389 = vmatprep.subr.mxu0 0.0
    %390 = vmatpush1.xpose.msra.mxu0 %v317
    %391 = vmatprep.subr.mxu0 0.0
    %392 = vmatpush1.xpose.msra.mxu0 %v314
    %393 = vmatprep.subr.mxu0 0.0
    %394 = vmatpush2.xpose.msra.mxu0 0.0
    %395 = vmatprep.subr.mxu0 0.0
    %396 = vmatpush2.xpose.msra.mxu0 0.0
    %397 = vmatprep.subr.mxu0 0.0
    %398 = vmatpush2.xpose.msra.mxu0 0.0
    %399 = vmatprep.subr.mxu0 0.0
    %400 = vmatpush2.xpose.msra.mxu0 0.0
    %401 = vmatprep.subr.mxu0 0.0
    %402 = vmatpush2.xpose.msra.mxu0 0.0
    %403 = vmatprep.subr.mxu0 0.0
    %404 = vmatpush2.xpose.msra.mxu0 0.0
    %405 = vmatprep.subr.mxu0 0.0
    %406 = vmatpush2.xpose.msra.mxu0 0.0
    %407 = vmatprep.subr.mxu0 0.0
    %408 = vmatpush2.xpose.msra.mxu0 0.0
    %409 = vmatprep.subr.mxu0 0.0
    %410 = vmatpush2.xpose.msra.mxu0 0.0
    %411 = vmatprep.subr.mxu0 0.0
    %412 = vmatpush2.xpose.msra.mxu0 0.0
    %413 = vmatprep.subr.mxu0 0.0
    %414 = vmatpush2.xpose.msra.mxu0 0.0
    %415 = vmatprep.subr.mxu0 0.0
    %416 = vmatpush2.xpose.msra.mxu0 0.0
    %417 = vmatprep.subr.mxu0 0.0
    %418 = vmatpush2.xpose.msra.mxu0 0.0
    %419 = vmatprep.subr.mxu0 0.0
    %420 = vmatpush2.xpose.msra.mxu0 0.0
    %421 = vmatprep.subr.mxu0 0.0
    %422 = vmatpush2.xpose.msra.mxu0 0.0
    %423 = vmatprep.subr.mxu0 0.0
    %424 = vmatpush2.xpose.msra.mxu0 0.0
    %425 = vmatprep.mubr.f32.mxu0 0.0
    %426 = vmatmul.mubr.f32.gmra.mxu0 %v311
    %v427 = vpop.f32.mrf.mxu0
    %v428 = vadd.f32 %v308, %v427
    %v429 = vpop.f32.mrf.mxu0
    %430 = vdwg.mxu0
    %v431 = vxor.u32 %v428, 2147483648
    %v432 = vmul.f32 %v431, 1.442695
    %v433 = vpow.pop %v432
    %v434 = vadd.f32 %v433, 1.0
    %v435 = vrcp.pop %v434
    %v436 = vmul.f32 1.0, %v435
    %437 = vst [vmem:[#allocation3] sm:$0x1] %v436
    // Predicated region
    $region22: #{dota2_mlp_forward.1} parent=1 // pred_check
      _
    $region23: #{dota2_mlp_forward.1} parent=1 // pred_check_branch
      %439 = sbr.rel (0) target = $region25
    $region24: #{dota2_mlp_forward.1} parent=1 // pred_region
      %s441 = ssub.s32 16, 16
      %442 = vsyncadd [#allocation4], %s441
      %s444 = sshll.u32 [#allocation3], 4
      %s445 = int_to_ptr.vmem [resolvable:$true] %s444
      %447 = dma.vmem_to_hbm [thread:$0]  %s445, 16, %s5, [#allocation4]
    $region25: #{dota2_mlp_forward.1} parent=1 // pred_fallthru
      _
    // Predicated region
    $region26: #{dota2_mlp_forward.1} parent=1 // pred_check
      _
    $region27: #{dota2_mlp_forward.1} parent=1 // pred_check_branch
      %449 = sbr.rel (0) target = $region29
    $region28: #{dota2_mlp_forward.1} parent=1 // pred_region
      %450 = dma.done [#allocation4], 16
    $region29: #{dota2_mlp_forward.1} parent=1 // pred_fallthru
      _
    %451 = vsyncpa [#allocation4], 1

</llo_original>
